<compile_context>
chip_gen: v5e
topology: v5e:2x2
jax: 0.10.0
libtpu: 0.0.40
codegen_flags: <defaults>
</compile_context>

<pallas_src>
import functools

import jax
import jax.numpy as jnp
from jax.experimental import pallas as pl
from jax.experimental.pallas import tpu as pltpu

_BN_EPS = 1e-5
_LANE = 128


# --------------------------------------------------------------------------- #
# Small helpers
# --------------------------------------------------------------------------- #
def _round_up(n, m):
    return ((n + m - 1) // m) * m


def _row_tiling(n_rows, cap):
    """Return (tile_rows, padded_rows).  tile divides padded_rows, both % 8 == 0."""
    cap = max(8, (cap // 8) * 8)
    if n_rows <= cap:
        t = _round_up(n_rows, 8)
        return t, t
    best = 0
    for t in range(8, cap + 1, 8):
        if n_rows % t == 0:
            best = t
    if best >= 256:
        return best, n_rows
    # Awkward divisor: zero-pad the row count to a multiple of a good tile
    # (padded rows contribute nothing / are masked out of the statistics).
    t = min(cap, 512)
    return t, _round_up(n_rows, t)


def _vmem_limit_bytes():
    cap = None
    try:
        cap = int(pltpu.get_tpu_info().vmem_capacity_bytes)
    except Exception:
        cap = None
    if cap is None:
        return 48 * 1024 * 1024          # safe everywhere
    if cap <= 64 * 1024 * 1024:
        return 44 * 1024 * 1024          # v7x-class parts (64 MiB VMEM)
    return 96 * 1024 * 1024              # v5e / v6e (128 MiB VMEM)


def _compiler_params():
    return pltpu.CompilerParams(
        dimension_semantics=("parallel",),
        vmem_limit_bytes=_vmem_limit_bytes(),
    )


def _relu6(y):
    return jnp.clip(y, 0.0, 6.0)


def _partial_stats(y):
    """(rows, C) -> (8, C): row 0 = sum, row 1 = sum of squares, rest zero."""
    s = jnp.sum(y, axis=0, keepdims=True)
    ss = jnp.sum(y * y, axis=0, keepdims=True)
    pad = jnp.zeros((6, y.shape[1]), jnp.float32)
    return jnp.concatenate([s, ss, pad], axis=0)


def _bn_scale_shift(s, ss, n, gamma, beta):
    """Fold biased batch stats + affine params into y * scale + shift."""
    mean = (s / n)[None, :]
    var = jnp.maximum(ss[None, :] / n - mean * mean, 0.0)
    scale = gamma * jax.lax.rsqrt(var + _BN_EPS)
    return scale, beta - mean * scale


# --------------------------------------------------------------------------- #
# Kernels
# --------------------------------------------------------------------------- #
def _expansion_stats_kernel(x_ref, w_exp_ref, stats_ref):
    # Pass 1: partial BN1 statistics of the expansion conv for this row tile.
    # x rows in the zero spatial padding produce all-zero y rows and therefore
    # contribute nothing to sum / sum-of-squares (n is applied on the host).
    y = jnp.dot(x_ref[...], w_exp_ref[...], preferred_element_type=jnp.float32)
    stats_ref[0] = _partial_stats(y)


def _spatial_kernel(*refs, Ho, Wo_pad, k, mask_cols):
    # Pass 2 (per image): expansion + BN1 + ReLU6 -> depthwise -> pointwise.
    if mask_cols:
        (xp_ref, w_exp_ref, sc1_ref, sh1_ref, wdw_ref, w_pw_ref,
         sp_mask_ref, col_mask_ref, y2_ref, stats_ref) = refs
    else:
        (xp_ref, w_exp_ref, sc1_ref, sh1_ref, wdw_ref, w_pw_ref,
         sp_mask_ref, y2_ref, stats_ref) = refs
        col_mask_ref = None

    _, Hp, Wpr, Cp = xp_ref.shape
    Ep = w_exp_ref.shape[-1]

    x = xp_ref[...].reshape(Hp * Wpr, Cp)                       # bf16
    y1 = jnp.dot(x, w_exp_ref[...], preferred_element_type=jnp.float32)
    y1 = _relu6(y1 * sc1_ref[...] + sh1_ref[...])
    # Depthwise must see exact zeros around the *activated* map: multiply by a
    # channel-invariant (Hp, Wpr, 1) interior mask (lane broadcast).
    y1 = y1.reshape(Hp, Wpr, Ep) * sp_mask_ref[...]

    # Depthwise k x k, stride 1: k sublane-axis slices (one per dj) and cheap
    # major-axis slices for the di shifts, accumulated on Wo padded to 8 so the
    # reshape below is a pure view.
    wdw = wdw_ref[...]                                          # (k*k, Ep) f32
    acc = jnp.zeros((Ho, Wo_pad, Ep), jnp.float32)
    for dj in range(k):
        col = y1[:, dj:dj + Wo_pad, :]
        for di in range(k):
            acc = acc + col[di:di + Ho, :, :] * wdw[di * k + dj]

    if mask_cols:
        # Columns >= Wo sampled real interior data: zero them so they drop out
        # of the BN2 statistics and of everything downstream.
        acc = acc * col_mask_ref[...]

    # Pointwise 1x1 conv (pre-BN2) + partial BN2 statistics.
    y2 = jnp.dot(acc.reshape(Ho * Wo_pad, Ep).astype(jnp.bfloat16), w_pw_ref[...],
                 preferred_element_type=jnp.float32)
    stats_ref[0] = _partial_stats(y2)
    y2_ref[0] = y2.astype(y2_ref.dtype)


def _linear_kernel(*refs, use_mask):
    # Pass 3: BN2 + ReLU6 -> linear conv; store pre-BN3 y3 (bf16) and its
    # partial BN3 statistics.  Fake rows (Wo padding / row-tiling padding) are
    # zeroed via the host-built row mask so they contribute nothing.
    if use_mask:
        y2_ref, mask_ref, sc2_ref, sh2_ref, w_lin_ref, y3_ref, stats_ref = refs
    else:
        y2_ref, sc2_ref, sh2_ref, w_lin_ref, y3_ref, stats_ref = refs
        mask_ref = None
    y2n = _relu6(y2_ref[...].astype(jnp.float32) * sc2_ref[...] + sh2_ref[...])
    if use_mask:
        y2n = y2n * mask_ref[...]
    y3 = jnp.dot(y2n.astype(jnp.bfloat16), w_lin_ref[...],
                 preferred_element_type=jnp.float32)
    stats_ref[0] = _partial_stats(y3)
    y3_ref[...] = y3.astype(y3_ref.dtype)


def _finalize_kernel(*refs, add_residual):
    # Pass 4: apply BN3 to the cached y3 (+ residual), store f32 output.
    if add_residual:
        y3_ref, xres_ref, sc3_ref, sh3_ref, o_ref = refs
    else:
        y3_ref, sc3_ref, sh3_ref, o_ref = refs
        xres_ref = None
    out = y3_ref[...].astype(jnp.float32) * sc3_ref[...] + sh3_ref[...]
    if add_residual:
        out = out + xres_ref[...]
    o_ref[...] = out


# --------------------------------------------------------------------------- #
# Wrappers
# --------------------------------------------------------------------------- #
def irb_forward_nhwc(x, params, *, k, s, p, row_tile=2048):
    """IRB forward in NHWC. x: (B, H, W, Cin) f32 -> (B, Ho, Wo, Cout) f32."""
    if s != 1:
        # TODO(synk): s > 1 needs a strided depthwise formulation whose Mosaic
        # lowering is verified (strided slices on sublane/major dims).
        raise NotImplementedError("irb_forward_nhwc currently supports s == 1 only")

    x = x.astype(jnp.float32)
    B, H, W, Cin = x.shape
    E = params["w_exp"].shape[1]
    Cout = params["w_lin"].shape[1]
    Ho = (H + 2 * p - k) // s + 1
    Wo = (W + 2 * p - k) // s + 1
    add_residual = (s == 1 and Cin == Cout and Ho == H and Wo == W)

    Cp = _round_up(Cin, _LANE)
    Ep = _round_up(E, _LANE)
    Op = _round_up(Cout, _LANE)

    Wo_pad = _round_up(Wo, 8)
    Hp = H + 2 * p
    Wpr = _round_up(max(W + 2 * p, Wo_pad + k - 1), 8)   # sublane-aligned width
    mask_cols = (Wo_pad != Wo)

    # ---- one-time layout prep (single bf16 spatially padded copy of x) ------
    x_bf16 = x.astype(jnp.bfloat16)
    x_sp = jnp.pad(x_bf16, ((0, 0), (p, p), (p, Wpr - W - p), (0, Cp - Cin)))

    w_exp = jnp.pad(params["w_exp"], ((0, Cp - Cin), (0, Ep - E))).astype(jnp.bfloat16)
    w_pw = jnp.pad(params["w_pw"], ((0, Ep - E), (0, Ep - E))).astype(jnp.bfloat16)
    w_lin = jnp.pad(params["w_lin"], ((0, Ep - E), (0, Op - Cout))).astype(jnp.bfloat16)
    w_dw = jnp.pad(params["w_dw"], ((0, 0), (0, 0), (0, Ep - E)))
    w_dw = w_dw.reshape(k * k, Ep).astype(jnp.float32)

    g1 = jnp.pad(params["g1"], ((0, 0), (0, Ep - E)))
    b1 = jnp.pad(params["b1"], ((0, 0), (0, Ep - E)))
    g2 = jnp.pad(params["g2"], ((0, 0), (0, Ep - E)))
    b2 = jnp.pad(params["b2"], ((0, 0), (0, Ep - E)))
    g3 = jnp.pad(params["g3"], ((0, 0), (0, Op - Cout)))
    b3 = jnp.pad(params["b3"], ((0, 0), (0, Op - Cout)))

    # Channel-invariant masks, precomputed on the host.
    hh = (jnp.arange(Hp) >= p) & (jnp.arange(Hp) < p + H)
    ww = (jnp.arange(Wpr) >= p) & (jnp.arange(Wpr) < p + W)
    sp_mask = (hh[:, None] & ww[None, :]).astype(jnp.float32)[:, :, None]  # (Hp,Wpr,1)
    col_mask = (jnp.arange(Wo_pad) < Wo).astype(jnp.float32)[None, :, None]  # (1,Wo_pad,1)

    cp = _compiler_params()

    def vec_spec(c):
        return pl.BlockSpec((1, c), lambda i: (0, 0))

    # ---- pass 1: BN1 batch statistics of the expansion conv ------------------
    N1 = B * H * W
    rows1 = B * Hp * Wpr
    rt1, rows1_grid = _row_tiling(rows1, row_tile)
    xsf = x_sp.reshape(rows1, Cp)
    if rows1_grid != rows1:
        xsf = jnp.pad(xsf, ((0, rows1_grid - rows1), (0, 0)))
    nt1 = rows1_grid // rt1
    stats1 = pl.pallas_call(
        _expansion_stats_kernel,
        out_shape=jax.ShapeDtypeStruct((nt1, 8, Ep), jnp.float32),
        grid=(nt1,),
        in_specs=[pl.BlockSpec((rt1, Cp), lambda i: (i, 0)),
                  pl.BlockSpec((Cp, Ep), lambda i: (0, 0))],
        out_specs=pl.BlockSpec((1, 8, Ep), lambda i: (i, 0, 0)),
        compiler_params=cp,
    )(xsf, w_exp)
    sc1, sh1 = _bn_scale_shift(jnp.sum(stats1[:, 0, :], axis=0),
                               jnp.sum(stats1[:, 1, :], axis=0), N1, g1, b1)

    # ---- pass 2: expansion + BN1 + ReLU6 + depthwise + pointwise, per image --
    HWp = Ho * Wo_pad
    args2 = [x_sp, w_exp, sc1, sh1, w_dw, w_pw, sp_mask]
    in_specs2 = [pl.BlockSpec((1, Hp, Wpr, Cp), lambda b: (b, 0, 0, 0)),
                 pl.BlockSpec((Cp, Ep), lambda b: (0, 0)),
                 vec_spec(Ep), vec_spec(Ep),
                 pl.BlockSpec((k * k, Ep), lambda b: (0, 0)),
                 pl.BlockSpec((Ep, Ep), lambda b: (0, 0)),
                 pl.BlockSpec((Hp, Wpr, 1), lambda b: (0, 0, 0))]
    if mask_cols:
        args2.append(col_mask)
        in_specs2.append(pl.BlockSpec((1, Wo_pad, 1), lambda b: (0, 0, 0)))
    y2, stats2 = pl.pallas_call(
        functools.partial(_spatial_kernel, Ho=Ho, Wo_pad=Wo_pad, k=k,
                          mask_cols=mask_cols),
        out_shape=(jax.ShapeDtypeStruct((B, HWp, Ep), jnp.bfloat16),
                   jax.ShapeDtypeStruct((B, 8, Ep), jnp.float32)),
        grid=(B,),
        in_specs=in_specs2,
        out_specs=(pl.BlockSpec((1, HWp, Ep), lambda b: (b, 0, 0)),
                   pl.BlockSpec((1, 8, Ep), lambda b: (b, 0, 0))),
        compiler_params=cp,
    )(*args2)
    N2_real = B * Ho * Wo
    sc2, sh2 = _bn_scale_shift(jnp.sum(stats2[:, 0, :], axis=0),
                               jnp.sum(stats2[:, 1, :], axis=0), N2_real, g2, b2)

    # ---- pass 3: BN2 + ReLU6 -> linear conv; cache y3 + BN3 statistics -------
    N2_alloc = B * HWp
    rt2, N2_grid = _row_tiling(N2_alloc, row_tile)
    nt2 = N2_grid // rt2
    y2f = y2.reshape(N2_alloc, Ep)
    if N2_grid != N2_alloc:
        y2f = jnp.pad(y2f, ((0, N2_grid - N2_alloc), (0, 0)))
    needs_mask = mask_cols or (N2_grid != N2_alloc)

    args3 = [y2f]
    in_specs3 = [pl.BlockSpec((rt2, Ep), lambda i: (i, 0))]
    if needs_mask:
        ridx = jnp.arange(N2_grid)
        row_mask = (((ridx % Wo_pad) < Wo) & (ridx < N2_alloc))
        row_mask = row_mask.astype(jnp.float32)[:, None]          # (N2_grid, 1)
        args3.append(row_mask)
        in_specs3.append(pl.BlockSpec((rt2, 1), lambda i: (i, 0)))
    args3 += [sc2, sh2, w_lin]
    in_specs3 += [vec_spec(Ep), vec_spec(Ep),
                  pl.BlockSpec((Ep, Op), lambda i: (0, 0))]
    y3, stats3 = pl.pallas_call(
        functools.partial(_linear_kernel, use_mask=needs_mask),
        out_shape=(jax.ShapeDtypeStruct((N2_grid, Op), jnp.bfloat16),
                   jax.ShapeDtypeStruct((nt2, 8, Op), jnp.float32)),
        grid=(nt2,),
        in_specs=in_specs3,
        out_specs=(pl.BlockSpec((rt2, Op), lambda i: (i, 0)),
                   pl.BlockSpec((1, 8, Op), lambda i: (i, 0, 0))),
        compiler_params=cp,
    )(*args3)
    sc3, sh3 = _bn_scale_shift(jnp.sum(stats3[:, 0, :], axis=0),
                               jnp.sum(stats3[:, 1, :], axis=0), N2_real, g3, b3)

    # ---- pass 4: BN3 on cached y3 (+ residual), store f32 output -------------
    if add_residual:
        x_res = jnp.pad(x, ((0, 0), (0, 0), (0, Wo_pad - W), (0, Op - Cin)))
        x_res = x_res.reshape(N2_alloc, Op)
        if N2_grid != N2_alloc:
            x_res = jnp.pad(x_res, ((0, N2_grid - N2_alloc), (0, 0)))
        args4 = (y3, x_res, sc3, sh3)
        in_specs4 = [pl.BlockSpec((rt2, Op), lambda i: (i, 0)),
                     pl.BlockSpec((rt2, Op), lambda i: (i, 0)),
                     vec_spec(Op), vec_spec(Op)]
    else:
        args4 = (y3, sc3, sh3)
        in_specs4 = [pl.BlockSpec((rt2, Op), lambda i: (i, 0)),
                     vec_spec(Op), vec_spec(Op)]
    out_flat = pl.pallas_call(
        functools.partial(_finalize_kernel, add_residual=add_residual),
        out_shape=jax.ShapeDtypeStruct((N2_grid, Op), jnp.float32),
        grid=(nt2,),
        in_specs=in_specs4,
        out_specs=pl.BlockSpec((rt2, Op), lambda i: (i, 0)),
        compiler_params=cp,
    )(*args4)

    out = out_flat[:N2_alloc].reshape(B, Ho, Wo_pad, Op)
    return out[:, :, :Wo, :Cout]


def irb_forward_nchw(x_nchw, params, *, k, s, p, row_tile=2048):
    """PyTorch-convention NCHW adapter.  If the surrounding model is already
    NHWC, call irb_forward_nhwc directly and skip these two HBM transposes."""
    x = jnp.transpose(x_nchw, (0, 2, 3, 1))
    y = irb_forward_nhwc(x, params, k=k, s=s, p=p, row_tile=row_tile)
    return jnp.transpose(y, (0, 3, 1, 2))


# --------------------------------------------------------------------------- #
# Pure-JAX reference (centered BatchNorm statistics) for validation
# --------------------------------------------------------------------------- #
def irb_reference_nchw(x_nchw, params, *, k, s, p, matmul_dtype=jnp.float32):
    x = jnp.transpose(x_nchw, (0, 2, 3, 1)).astype(jnp.float32)
    B, H, W, Cin = x.shape
    E = params["w_exp"].shape[1]
    Cout = params["w_lin"].shape[1]
    Ho = (H + 2 * p - k) // s + 1
    Wo = (W + 2 * p - k) // s + 1

    def mm(a, w):
        return jnp.dot(a.astype(matmul_dtype), w.astype(matmul_dtype),
                       preferred_element_type=jnp.float32)

    def bn(y2d, gamma, beta):
        mean = jnp.mean(y2d, axis=0, keepdims=True)
        var = jnp.mean((y2d - mean) ** 2, axis=0, keepdims=True)
        return (y2d - mean) * jax.lax.rsqrt(var + _BN_EPS) * gamma + beta

    x2d = x.reshape(B * H * W, Cin)
    y = _relu6(bn(mm(x2d, params["w_exp"]), params["g1"], params["b1"]))
    y4 = jnp.pad(y.reshape(B, H, W, E), ((0, 0), (p, p), (p, p), (0, 0)))
    acc = jnp.zeros((B, Ho, Wo, E), jnp.float32)
    for di in range(k):
        for dj in range(k):
            win = y4[:, di:di + (Ho - 1) * s + 1:s, dj:dj + (Wo - 1) * s + 1:s, :]
            acc = acc + win * params["w_dw"][di, dj, :]
    y = acc.reshape(B * Ho * Wo, E)
    y = _relu6(bn(mm(y, params["w_pw"]), params["g2"], params["b2"]))
    y = bn(mm(y, params["w_lin"]), params["g3"], params["b3"])
    if s == 1 and Cin == Cout:
        y = y + x2d
    return jnp.transpose(y.reshape(B, Ho, Wo, Cout), (0, 3, 1, 2))


def make_params(key, in_channels, expansion_filters, out_channels, k):
    """Deterministic synthetic parameters (PyTorch shapes -> kernel layout)."""
    ks = jax.random.split(key, 10)
    Cin, E, Cout = in_channels, expansion_filters, out_channels
    w_exp_pt = 0.2 * jax.random.normal(ks[0], (E, Cin, 1, 1), jnp.float32)
    w_dw_pt = 0.2 * jax.random.normal(ks[1], (E, 1, k, k), jnp.float32)
    w_pw_pt = 0.2 * jax.random.normal(ks[2], (E, E, 1, 1), jnp.float32)
    w_lin_pt = 0.2 * jax.random.normal(ks[3], (Cout, E, 1, 1), jnp.float32)
    return {
        "w_exp": jnp.transpose(w_exp_pt[:, :, 0, 0], (1, 0)),       # (Cin, E)
        "w_dw": jnp.transpose(w_dw_pt[:, 0, :, :], (1, 2, 0)),      # (k, k, E)
        "w_pw": jnp.transpose(w_pw_pt[:, :, 0, 0], (1, 0)),         # (E, E)
        "w_lin": jnp.transpose(w_lin_pt[:, :, 0, 0], (1, 0)),       # (E, Cout)
        "g1": 1.0 + 0.1 * jax.random.normal(ks[4], (1, E), jnp.float32),
        "b1": 0.1 * jax.random.normal(ks[5], (1, E), jnp.float32),
        "g2": 1.0 + 0.1 * jax.random.normal(ks[6], (1, E), jnp.float32),
        "b2": 0.1 * jax.random.normal(ks[7], (1, E), jnp.float32),
        "g3": 1.0 + 0.1 * jax.random.normal(ks[8], (1, Cout), jnp.float32),
        "b3": 0.1 * jax.random.normal(ks[9], (1, Cout), jnp.float32),
    }


if __name__ == "__main__":
    # Small shapes consistent with the module; residual path active
    # (s == 1 and in_channels == out_channels).  W = 14 is deliberately not a
    # multiple of 8 so the Wo-padding / masking paths are exercised.
    B, Cin, H, W = 2, 8, 14, 14
    E, Cout = 24, 8
    k, s, p = 3, 1, 1

    key = jax.random.PRNGKey(0)
    kx, kp = jax.random.split(key)
    x = jax.random.normal(kx, (B, Cin, H, W), jnp.float32)
    params = make_params(kp, Cin, E, Cout, k)

    # row_tile=256 so the demo exercises multi-tile grids, cross-tile BN stats
    # and the zero-padded-row masking in passes 3/4.
    out = irb_forward_nchw(x, params, k=k, s=s, p=p, row_tile=256)
    out = jax.block_until_ready(out)

    ref_bf16 = irb_reference_nchw(x, params, k=k, s=s, p=p,
                                  matmul_dtype=jnp.bfloat16)
    ref_f32 = irb_reference_nchw(x, params, k=k, s=s, p=p,
                                 matmul_dtype=jnp.float32)
    assert out.shape == ref_f32.shape == (B, Cout, H, W)

    # Logic check vs a reference with the same matmul precision policy
    # (tolerance covers the bf16 storage of the y2 / y3 intermediates).
    err_bf16 = float(jnp.max(jnp.abs(out - ref_bf16)))
    assert jnp.allclose(out, ref_bf16, atol=8e-2, rtol=8e-2), err_bf16
    # Precision-policy sanity bound vs the full-f32 reference.
    assert float(jnp.max(jnp.abs(out - ref_f32))) < 0.35

    print("KERNEL_OK")
</pallas_src>

<mosaic_0001>
module attributes {stable_mosaic.version = 11 : i64} {
  func.func @_expansion_stats_kernel(%arg0: i32, %arg1: memref<256x128xbf16, #tpu.memory_space<vmem>>, %arg2: memref<128x128xbf16, #tpu.memory_space<vmem>>, %arg3: memref<1x8x128xf32, #tpu.memory_space<vmem>>) attributes {dimension_semantics = [#tpu.dimension_semantics<parallel>], iteration_bounds = array<i64: 3>, scalar_prefetch = 0 : i64, scratch_operands = 0 : i64, tpu.core_type = #tpu.core_type<tc>, window_params = [{transform_indices = @transform_0, window_bounds = array<i64: 256, 128>}, {pipeline_mode = #tpu.pipeline_mode<synchronous>, transform_indices = @transform_1, window_bounds = array<i64: 128, 128>}, {transform_indices = @transform_2, window_bounds = array<i64: 1, 8, 128>}]} {
    %c0 = arith.constant 0 : index
    %c0_0 = arith.constant 0 : index
    %0 = vector.load %arg1[%c0, %c0_0] : memref<256x128xbf16, #tpu.memory_space<vmem>>, vector<256x128xbf16>
    %c0_1 = arith.constant 0 : index
    %c0_2 = arith.constant 0 : index
    %1 = vector.load %arg2[%c0_1, %c0_2] : memref<128x128xbf16, #tpu.memory_space<vmem>>, vector<128x128xbf16>
    %cst = arith.constant dense<0.000000e+00> : vector<256x128xf32>
    %2 = tpu.matmul %0, %1, %cst {dimension_numbers = #tpu.dot_dimension_numbers<[1], [0], [0], [1], [0, 0, 1, 1], [], []>} : vector<256x128xbf16>, vector<128x128xbf16>, vector<256x128xf32> -> vector<256x128xf32>
    %cst_3 = arith.constant dense<0.000000e+00> : vector<128xf32>
    %3 = vector.multi_reduction <add>, %2, %cst_3 [0] : vector<256x128xf32> to vector<128xf32>
    %4 = vector.shape_cast %3 : vector<128xf32> to vector<1x128xf32>
    %5 = arith.mulf %2, %2 : vector<256x128xf32>
    %cst_4 = arith.constant dense<0.000000e+00> : vector<128xf32>
    %6 = vector.multi_reduction <add>, %5, %cst_4 [0] : vector<256x128xf32> to vector<128xf32>
    %7 = vector.shape_cast %6 : vector<128xf32> to vector<1x128xf32>
    %cst_5 = arith.constant 0.000000e+00 : f32
    %8 = vector.broadcast %cst_5 : f32 to vector<6x128xf32>
    %9 = tpu.concatenate %4, %7, %8 in 0 : vector<1x128xf32>, vector<1x128xf32>, vector<6x128xf32> -> vector<8x128xf32>
    %c0_6 = arith.constant 0 : index
    %c0_7 = arith.constant 0 : index
    %c0_8 = arith.constant 0 : index
    %10 = vector.load %arg3[%c0_6, %c0_7, %c0_8] : memref<1x8x128xf32, #tpu.memory_space<vmem>>, vector<1x8x128xf32>
    %11 = vector.shape_cast %10 : vector<1x8x128xf32> to vector<8x128xf32>
    %12 = vector.shape_cast %9 : vector<8x128xf32> to vector<1x8x128xf32>
    tpu.vector_store %arg3[%c0_6, %c0_7, %c0_8], %12 {strides = array<i32>} : memref<1x8x128xf32, #tpu.memory_space<vmem>>, vector<1x8x128xf32>,
    return
  }
  func.func @transform_0(%arg0: i32) -> (i32, i32) {
    %c0_i32 = arith.constant 0 : i32
    %c0_i32_0 = arith.constant 0 : i32
    return %arg0, %c0_i32 : i32, i32
  }
  func.func @transform_1(%arg0: i32) -> (i32, i32) {
    %c0_i32 = arith.constant 0 : i32
    %c0_i32_0 = arith.constant 0 : i32
    %c0_i32_1 = arith.constant 0 : i32
    return %c0_i32, %c0_i32_0 : i32, i32
  }
  func.func @transform_2(%arg0: i32) -> (i32, i32, i32) {
    %c0_i32 = arith.constant 0 : i32
    %c0_i32_0 = arith.constant 0 : i32
    %c0_i32_1 = arith.constant 0 : i32
    return %arg0, %c0_i32, %c0_i32_0 : i32, i32, i32
  }
}

</mosaic_0001>

<llo_original>
// kernel: tpu_custom_call.1
$region0: #{tpu_custom_call.1}
  #allocation0 [shape = 'u32[]', space=smem, size = 0x4, offset = 0x4, fixed_abs, tag = 'smem constant byte address 0x4 - core index']
  #allocation1 [shape = 'u32[72,128]{1,0:T(1,128)}', space=vmem, size = 0x9000, scoped, tag = 'internal scratch']
  %s0 = inlined_call_operand.hbm [shape: bf16[768,128], index: 0, kind: input, shape index: {}]
  %s1 = inlined_call_operand.hbm [shape: bf16[128,128], index: 1, kind: input, shape index: {}]
  %s2 = inlined_call_operand.hbm [shape: f32[3,8,128], index: 2, kind: output, shape index: {}]
  %s3 = sld [smem:[#allocation0]]
  $region49: #{tpu_custom_call.1} parent=0
    _
  %s5 = ssub.s32 1, %s3
  %s6 = scalar_select 0, %s5, %s3
  $region1: #{tpu_custom_call.1} parent=0
    #allocation2 [shape = 'u8[131072]{0}', space=vmem, size = 0x20000, scoped, tag = 'input window, operand 0']
    #allocation3 [shape = 's32[2]{0}', space=sflag, size = 0x8, scoped, tag = 'scoped memory for tpu_custom_call.1']
    #allocation4 [shape = 's32[2]{0}', space=sflag, size = 0x8, scoped, tag = 'scoped memory for tpu_custom_call.1']
    #allocation5 [shape = 'u8[32768]{0}', space=vmem, size = 0x8000, scoped, tag = 'input window, operand 1, single buffered']
    #allocation6 [shape = 's32[1]{0}', space=sflag, size = 0x4, scoped, tag = 'scoped memory for tpu_custom_call.1']
    #allocation7 [shape = 'u8[8192]{0}', space=vmem, size = 0x2000, scoped, tag = 'output window, operand 0']
    %7 = vsyncpa [#allocation3], 0
    %s8 = scalar_lea.sflag [#allocation3], 1
    %9 = vsyncpa %s8, 0
    %10 = vsyncpa [#allocation6], 0
    %11 = vsyncpa [#allocation4], 0
    %s12 = scalar_lea.sflag [#allocation4], 1
    %13 = vsyncpa %s12, 0
    loop: start=0, step=1, limit=5
    $region2: #{tpu_custom_call.1} parent=1 // loop_pre_header
      _
    $region3: #{tpu_custom_call.1} parent=1 // loop_header
      %s15 = sphi 0, %s19
      %p16 = scmp.ge.s32.totalorder %s15, 5
      %s25 = sphi 0, %s27
      %s28 = sphi 0, %s25
      %s29 = sphi 0, %s28
      %s45 = sphi 0, %s29
      %s49 = sphi 0, %s49
      %s51 = sphi 0, %s49
      %s52 = sphi 0, %s51
      %s66 = sphi 0, %s52
      %s72 = sphi 0, %s74
      %s75 = sphi 0, %s72
      %s76 = sphi 0, %s75
      %s92 = sphi 0, %s76
    $region4: #{tpu_custom_call.1} parent=1 // loop_header_branch
      %18 = sbr.rel (%p16) target = $region8
    $region5: #{tpu_custom_call.1} parent=1 // loop_body
      %s20 = ssub.s32 %s15, 1
      %s21 = ssub.s32 %s15, 2
      %s22 = sadd.s32 %s15, 1
      %s23 = ssub.s32 %s15, %s22
      %p24 = scmp.eq.s32.totalorder %s23, 0
      %s26 = sadd.s32 %s25, 1
      %s27 = scalar_select %p24, %s25, %s26
      %p30 = pneg %p24
      %p31 = scmp.eq.s32.totalorder %s15, 2
      %p32 = por %p30, %p31
      %p33 = scmp.ne.s32.totalorder %s25, %s28
      %p34 = scmp.eq.s32.totalorder %s15, 0
      %p35 = por %p33, %p34
      %p36 = scmp.ne.s32.totalorder %s25, %s28
      %p37 = scmp.eq.s32.totalorder %s20, 2
      %p38 = por %p36, %p37
      %p39 = scmp.ne.s32.totalorder %s28, %s29
      %p40 = scmp.eq.s32.totalorder %s20, 0
      %p41 = por %p39, %p40
      %p42 = scmp.ne.s32.totalorder %s28, %s29
      %p43 = scmp.eq.s32.totalorder %s21, 2
      %p44 = por %p42, %p43
      %p46 = scmp.ne.s32.totalorder %s29, %s45
      %p47 = scmp.eq.s32.totalorder %s21, 0
      %p48 = por %p46, %p47
      %s50 = sadd.s32 %s49, 1
      %p53 = scmp.eq.s32.totalorder %s15, 2
      %p54 = scmp.ne.s32.totalorder %s49, %s51
      %p55 = scmp.eq.s32.totalorder %s15, 0
      %p56 = por %p54, %p55
      %p57 = scmp.ne.s32.totalorder %s49, %s51
      %p58 = scmp.eq.s32.totalorder %s20, 2
      %p59 = por %p57, %p58
      %p60 = scmp.ne.s32.totalorder %s51, %s52
      %p61 = scmp.eq.s32.totalorder %s20, 0
      %p62 = por %p60, %p61
      %p63 = scmp.ne.s32.totalorder %s51, %s52
      %p64 = scmp.eq.s32.totalorder %s21, 2
      %p65 = por %p63, %p64
      %p67 = scmp.ne.s32.totalorder %s52, %s66
      %p68 = scmp.eq.s32.totalorder %s21, 0
      %p69 = por %p67, %p68
      %s70 = ssub.s32 %s15, %s22
      %p71 = scmp.eq.s32.totalorder %s70, 0
      %s73 = sadd.s32 %s72, 1
      %s74 = scalar_select %p71, %s72, %s73
      %p77 = pneg %p71
      %p78 = scmp.eq.s32.totalorder %s15, 2
      %p79 = por %p77, %p78
      %p80 = scmp.ne.s32.totalorder %s72, %s75
      %p81 = scmp.eq.s32.totalorder %s15, 0
      %p82 = por %p80, %p81
      %p83 = scmp.ne.s32.totalorder %s72, %s75
      %p84 = scmp.eq.s32.totalorder %s20, 2
      %p85 = por %p83, %p84
      %p86 = scmp.ne.s32.totalorder %s75, %s76
      %p87 = scmp.eq.s32.totalorder %s20, 0
      %p88 = por %p86, %p87
      %p89 = scmp.ne.s32.totalorder %s75, %s76
      %p90 = scmp.eq.s32.totalorder %s21, 2
      %p91 = por %p89, %p90
      %p93 = scmp.ne.s32.totalorder %s76, %s92
      %p94 = scmp.eq.s32.totalorder %s21, 0
      %p95 = por %p93, %p94
      %p96 = scmp.le.s32.totalorder 1, %s15
      %p97 = scmp.lt.s32.totalorder %s15, 4
      %p98 = pnand %p96, %p97
      %p99 = pneg %p98
      // Predicated region
      $region9: #{tpu_custom_call.1} parent=5 // pred_check
        _
      $region10: #{tpu_custom_call.1} parent=5 // pred_check_branch
        %101 = sbr.rel (%p98) target = $region12
      $region11: #{tpu_custom_call.1} parent=5 // pred_region
        %s102 = ssub.s32 %s15, 1
        // Predicated region
        $region13: #{tpu_custom_call.1} parent=11 // pred_check
          %p103 = pneg %p62
        $region14: #{tpu_custom_call.1} parent=11 // pred_check_branch
          %105 = sbr.rel (%p103) target = $region16
        $region15: #{tpu_custom_call.1} parent=11 // pred_region
          %107 = vsyncadd [#allocation6], 0
          %s108 = sshll.u32 %s1, 4
          %s109 = int_to_ptr.hbm [resolvable:$true] %s108
          %s110 = sshll.u32 [#allocation5], 4
          %s111 = int_to_ptr.vmem [resolvable:$true] %s110
          %116 = dma.hbm_to_vmem [thread:$0]  %s109, 1024, %s111, [#allocation6], 64, 64, 4
        $region16: #{tpu_custom_call.1} parent=11 // pred_fallthru
          _
      $region12: #{tpu_custom_call.1} parent=5 // pred_fallthru
        _
      %p117 = scmp.lt.s32.totalorder %s15, 3
      // Predicated region
      $region17: #{tpu_custom_call.1} parent=5 // pred_check
        %p118 = pneg %p117
      $region18: #{tpu_custom_call.1} parent=5 // pred_check_branch
        %120 = sbr.rel (%p118) target = $region20
      $region19: #{tpu_custom_call.1} parent=5 // pred_region
        // Predicated region
        $region21: #{tpu_custom_call.1} parent=19 // pred_check
          %p121 = pneg %p35
        $region22: #{tpu_custom_call.1} parent=19 // pred_check_branch
          %123 = sbr.rel (%p121) target = $region24
        $region23: #{tpu_custom_call.1} parent=19 // pred_region
          %s124 = sand.u32 %s25, 1
          %s125 = scalar_lea.sflag [#allocation3], %s124
          %s126 = sand.u32 %s25, 1
          %s127 = smul.addr %s126, 128
          %s128 = scalar_lea.vmem [#allocation2], %s127
          %s129 = smul.u32 32, %s15
          %131 = vsyncadd %s125, 0
          %s132 = smul.addr %s129, 4
          %s133 = scalar_lea.hbm %s0, %s132
          %s134 = sshll.u32 %s133, 4
          %s135 = int_to_ptr.hbm [resolvable:$true] %s134
          %s136 = sshll.u32 %s128, 4
          %s137 = int_to_ptr.vmem [resolvable:$true] %s136
          %142 = dma.hbm_to_vmem [thread:$0]  %s135, 2048, %s137, %s125, 64, 64, 4
        $region24: #{tpu_custom_call.1} parent=19 // pred_fallthru
          _
      $region20: #{tpu_custom_call.1} parent=5 // pred_fallthru
        _
      %p143 = scmp.le.s32.totalorder 1, %s15
      %p144 = scmp.lt.s32.totalorder %s15, 4
      %p145 = pnand %p143, %p144
      %p146 = pneg %p145
      // Predicated region
      $region25: #{tpu_custom_call.1} parent=5 // pred_check
        _
      $region26: #{tpu_custom_call.1} parent=5 // pred_check_branch
        %148 = sbr.rel (%p145) target = $region28
      $region27: #{tpu_custom_call.1} parent=5 // pred_region
        %s149 = ssub.s32 %s15, 1
        %s150 = sand.u32 %s28, 1
        %s151 = scalar_lea.sflag [#allocation3], %s150
        %s152 = sand.u32 %s28, 1
        %s153 = smul.addr %s152, 128
        %s154 = scalar_lea.vmem [#allocation2], %s153
        // Predicated region
        $region29: #{tpu_custom_call.1} parent=27 // pred_check
          %p155 = pneg %p41
        $region30: #{tpu_custom_call.1} parent=27 // pred_check_branch
          %157 = sbr.rel (%p155) target = $region32
        $region31: #{tpu_custom_call.1} parent=27 // pred_region
          %159 = dma.done %s151, 2048
        $region32: #{tpu_custom_call.1} parent=27 // pred_fallthru
          _
        // Predicated region
        $region33: #{tpu_custom_call.1} parent=27 // pred_check
          %p160 = pneg %p62
        $region34: #{tpu_custom_call.1} parent=27 // pred_check_branch
          %162 = sbr.rel (%p160) target = $region36
        $region35: #{tpu_custom_call.1} parent=27 // pred_region
          %164 = dma.done [#allocation6], 1024
        $region36: #{tpu_custom_call.1} parent=27 // pred_fallthru
          _
        %s165 = sand.u32 %s28, 1
        %s166 = scalar_lea.sflag [#allocation3], %s165
        %s167 = sand.u32 %s28, 1
        %s168 = smul.addr %s167, 128
        %s169 = scalar_lea.vmem [#allocation2], %s168
        %p170 = pneg %p41
        %p171 = pneg %p38
        %p172 = pneg %p62
        %p173 = pneg %p59
        %p174 = pneg %p88
        %p175 = pneg %p85
        %s176 = sand.u32 %s75, 1
        %s177 = scalar_lea.sflag [#allocation4], %s176
        %s178 = sand.u32 %s75, 1
        %s179 = smul.addr %s178, 8
        %s180 = scalar_lea.vmem [#allocation7], %s179
        %s181 = smul.u32 32, %s20
        %v182 = vld [vmem:[%s154] sm:$0xf]
        %v183 = vld [vmem:[%s154 + $0x4] sm:$0xf]
        %v184 = vld [vmem:[%s154 + $0x8] sm:$0xf]
        %v185 = vld [vmem:[%s154 + $0xc] sm:$0xf]
        %v186 = vld [vmem:[%s154 + $0x10] sm:$0xf]
        %v187 = vld [vmem:[%s154 + $0x14] sm:$0xf]
        %v188 = vld [vmem:[%s154 + $0x18] sm:$0xf]
        %v189 = vld [vmem:[%s154 + $0x1c] sm:$0xf]
        %v190 = vld [vmem:[%s154 + $0x20] sm:$0xf]
        %v191 = vld [vmem:[%s154 + $0x24] sm:$0xf]
        %v192 = vld [vmem:[%s154 + $0x28] sm:$0xf]
        %v193 = vld [vmem:[%s154 + $0x2c] sm:$0xf]
        %v194 = vld [vmem:[%s154 + $0x30] sm:$0xf]
        %v195 = vld [vmem:[%s154 + $0x34] sm:$0xf]
        %v196 = vld [vmem:[%s154 + $0x38] sm:$0xf]
        %v197 = vld [vmem:[%s154 + $0x3c] sm:$0xf]
        %v198 = vld [vmem:[%s154 + $0x40] sm:$0xf]
        %v199 = vld [vmem:[%s154 + $0x44] sm:$0xf]
        %v200 = vld [vmem:[%s154 + $0x48] sm:$0xf]
        %v201 = vld [vmem:[%s154 + $0x4c] sm:$0xf]
        %v202 = vld [vmem:[%s154 + $0x50] sm:$0xf]
        %v203 = vld [vmem:[%s154 + $0x54] sm:$0xf]
        %v204 = vld [vmem:[%s154 + $0x58] sm:$0xf]
        %v205 = vld [vmem:[%s154 + $0x5c] sm:$0xf]
        %v206 = vld [vmem:[%s154 + $0x60] sm:$0xf]
        %v207 = vld [vmem:[%s154 + $0x64] sm:$0xf]
        %v208 = vld [vmem:[%s154 + $0x68] sm:$0xf]
        %v209 = vld [vmem:[%s154 + $0x6c] sm:$0xf]
        %v210 = vld [vmem:[%s154 + $0x70] sm:$0xf]
        %v211 = vld [vmem:[%s154 + $0x74] sm:$0xf]
        %v212 = vld [vmem:[%s154 + $0x78] sm:$0xf]
        %v213 = vld [vmem:[%s154 + $0x7c] sm:$0xf]
        %v214 = vld [vmem:[#allocation5] sm:$0xf]
        %v215 = vld [vmem:[#allocation5 + $0x4] sm:$0xf]
        %v216 = vld [vmem:[#allocation5 + $0x8] sm:$0xf]
        %v217 = vld [vmem:[#allocation5 + $0xc] sm:$0xf]
        %v218 = vld [vmem:[#allocation5 + $0x10] sm:$0xf]
        %v219 = vld [vmem:[#allocation5 + $0x14] sm:$0xf]
        %v220 = vld [vmem:[#allocation5 + $0x18] sm:$0xf]
        %v221 = vld [vmem:[#allocation5 + $0x1c] sm:$0xf]
        %v222 = vld [vmem:[#allocation5 + $0x20] sm:$0xf]
        %v223 = vld [vmem:[#allocation5 + $0x24] sm:$0xf]
        %v224 = vld [vmem:[#allocation5 + $0x28] sm:$0xf]
        %v225 = vld [vmem:[#allocation5 + $0x2c] sm:$0xf]
        %v226 = vld [vmem:[#allocation5 + $0x30] sm:$0xf]
        %v227 = vld [vmem:[#allocation5 + $0x34] sm:$0xf]
        %v228 = vld [vmem:[#allocation5 + $0x38] sm:$0xf]
        %v229 = vld [vmem:[#allocation5 + $0x3c] sm:$0xf]
        %v262 = vunpack.c.l.b16 %v182
        %v263 = vunpack.c.l.b16 %v183
        %v264 = vunpack.c.l.b16 %v184
        %v265 = vunpack.c.l.b16 %v185
        %v266 = vunpack.c.l.b16 %v186
        %v267 = vunpack.c.l.b16 %v187
        %v268 = vunpack.c.l.b16 %v188
        %v269 = vunpack.c.l.b16 %v189
        %v270 = vunpack.c.l.b16 %v190
        %v271 = vunpack.c.l.b16 %v191
        %v272 = vunpack.c.l.b16 %v192
        %v273 = vunpack.c.l.b16 %v193
        %v274 = vunpack.c.l.b16 %v194
        %v275 = vunpack.c.l.b16 %v195
        %v276 = vunpack.c.l.b16 %v196
        %v277 = vunpack.c.l.b16 %v197
        %v278 = vunpack.c.l.b16 %v198
        %v279 = vunpack.c.l.b16 %v199
        %v280 = vunpack.c.l.b16 %v200
        %v281 = vunpack.c.l.b16 %v201
        %v282 = vunpack.c.l.b16 %v202
        %v283 = vunpack.c.l.b16 %v203
        %v284 = vunpack.c.l.b16 %v204
        %v285 = vunpack.c.l.b16 %v205
        %v286 = vunpack.c.l.b16 %v206
        %v287 = vunpack.c.l.b16 %v207
        %v288 = vunpack.c.l.b16 %v208
        %v289 = vunpack.c.l.b16 %v209
        %v290 = vunpack.c.l.b16 %v210
        %v291 = vunpack.c.l.b16 %v211
        %v292 = vunpack.c.l.b16 %v212
        %v293 = vunpack.c.l.b16 %v213
        %v294 = vpack.c.b16 %v263, %v262
        %v295 = vpack.c.b16 %v265, %v264
        %v296 = vpack.c.b16 %v267, %v266
        %v297 = vpack.c.b16 %v269, %v268
        %v298 = vpack.c.b16 %v271, %v270
        %v299 = vpack.c.b16 %v273, %v272
        %v300 = vpack.c.b16 %v275, %v274
        %v301 = vpack.c.b16 %v277, %v276
        %v302 = vpack.c.b16 %v279, %v278
        %v303 = vpack.c.b16 %v281, %v280
        %v304 = vpack.c.b16 %v283, %v282
        %v305 = vpack.c.b16 %v285, %v284
        %v306 = vpack.c.b16 %v287, %v286
        %v307 = vpack.c.b16 %v289, %v288
        %v308 = vpack.c.b16 %v291, %v290
        %v309 = vpack.c.b16 %v293, %v292
        %v342 = vunpack.c.l.b16 %v214
        %v343 = vunpack.c.l.b16 %v215
        %v344 = vunpack.c.l.b16 %v216
        %v345 = vunpack.c.l.b16 %v217
        %v346 = vunpack.c.l.b16 %v218
        %v347 = vunpack.c.l.b16 %v219
        %v348 = vunpack.c.l.b16 %v220
        %v349 = vunpack.c.l.b16 %v221
        %v350 = vunpack.c.l.b16 %v222
        %v351 = vunpack.c.l.b16 %v223
        %v352 = vunpack.c.l.b16 %v224
        %v353 = vunpack.c.l.b16 %v225
        %v354 = vunpack.c.l.b16 %v226
        %v355 = vunpack.c.l.b16 %v227
        %v356 = vunpack.c.l.b16 %v228
        %v357 = vunpack.c.l.b16 %v229
        %v358 = vpack.c.b16 %v343, %v342
        %v359 = vpack.c.b16 %v345, %v344
        %v360 = vpack.c.b16 %v347, %v346
        %v361 = vpack.c.b16 %v349, %v348
        %v362 = vpack.c.b16 %v351, %v350
        %v363 = vpack.c.b16 %v353, %v352
        %v364 = vpack.c.b16 %v355, %v354
        %v365 = vpack.c.b16 %v357, %v356
        %374 = vmatpush.bf16.msra.mxu0 %v365
        %375 = vmatpush.bf16.msra.mxu0 %v364
        %376 = vmatpush.bf16.msra.mxu0 %v363
        %377 = vmatpush.bf16.msra.mxu0 %v362
        %378 = vmatpush.bf16.msra.mxu0 %v361
        %379 = vmatpush.bf16.msra.mxu0 %v360
        %380 = vmatpush.bf16.msra.mxu0 %v359
        %381 = vmatpush.bf16.msra.mxu0 %v358
        %382 = vmatmul.bf16.gmra.mxu0 %v294
        %v383 = vpop.f32.mrf.mxu0
        %v384 = vadd.f32 0.0, %v383
        %v385 = vpop.f32.mrf.mxu0
        %v386 = vadd.f32 0.0, %v385
        %387 = vmatmul.bf16.gmra.mxu0 %v295
        %v388 = vpop.f32.mrf.mxu0
        %v389 = vadd.f32 0.0, %v388
        %v390 = vpop.f32.mrf.mxu0
        %v391 = vadd.f32 0.0, %v390
        %392 = vmatmul.bf16.gmra.mxu0 %v296
        %v393 = vpop.f32.mrf.mxu0
        %v394 = vadd.f32 0.0, %v393
        %v395 = vpop.f32.mrf.mxu0
        %v396 = vadd.f32 0.0, %v395
        %397 = vmatmul.bf16.gmra.mxu0 %v297
        %v398 = vpop.f32.mrf.mxu0
        %v399 = vadd.f32 0.0, %v398
        %v400 = vpop.f32.mrf.mxu0
        %v401 = vadd.f32 0.0, %v400
        %402 = vmatmul.bf16.gmra.mxu0 %v298
        %v403 = vpop.f32.mrf.mxu0
        %v404 = vadd.f32 0.0, %v403
        %v405 = vpop.f32.mrf.mxu0
        %v406 = vadd.f32 0.0, %v405
        %407 = vmatmul.bf16.gmra.mxu0 %v299
        %v408 = vpop.f32.mrf.mxu0
        %v409 = vadd.f32 0.0, %v408
        %v410 = vpop.f32.mrf.mxu0
        %v411 = vadd.f32 0.0, %v410
        %412 = vmatmul.bf16.gmra.mxu0 %v300
        %v413 = vpop.f32.mrf.mxu0
        %v414 = vadd.f32 0.0, %v413
        %v415 = vpop.f32.mrf.mxu0
        %v416 = vadd.f32 0.0, %v415
        %417 = vmatmul.bf16.gmra.mxu0 %v301
        %v418 = vpop.f32.mrf.mxu0
        %v419 = vadd.f32 0.0, %v418
        %v420 = vpop.f32.mrf.mxu0
        %v421 = vadd.f32 0.0, %v420
        %422 = vmatmul.bf16.gmra.mxu0 %v302
        %v423 = vpop.f32.mrf.mxu0
        %v424 = vadd.f32 0.0, %v423
        %v425 = vpop.f32.mrf.mxu0
        %v426 = vadd.f32 0.0, %v425
        %427 = vmatmul.bf16.gmra.mxu0 %v303
        %v428 = vpop.f32.mrf.mxu0
        %v429 = vadd.f32 0.0, %v428
        %v430 = vpop.f32.mrf.mxu0
        %v431 = vadd.f32 0.0, %v430
        %432 = vmatmul.bf16.gmra.mxu0 %v304
        %v433 = vpop.f32.mrf.mxu0
        %v434 = vadd.f32 0.0, %v433
        %v435 = vpop.f32.mrf.mxu0
        %v436 = vadd.f32 0.0, %v435
        %437 = vmatmul.bf16.gmra.mxu0 %v305
        %v438 = vpop.f32.mrf.mxu0
        %v439 = vadd.f32 0.0, %v438
        %v440 = vpop.f32.mrf.mxu0
        %v441 = vadd.f32 0.0, %v440
        %442 = vmatmul.bf16.gmra.mxu0 %v306
        %v443 = vpop.f32.mrf.mxu0
        %v444 = vadd.f32 0.0, %v443
        %v445 = vpop.f32.mrf.mxu0
        %v446 = vadd.f32 0.0, %v445
        %447 = vmatmul.bf16.gmra.mxu0 %v307
        %v448 = vpop.f32.mrf.mxu0
        %v449 = vadd.f32 0.0, %v448
        %v450 = vpop.f32.mrf.mxu0
        %v451 = vadd.f32 0.0, %v450
        %452 = vmatmul.bf16.gmra.mxu0 %v308
        %v453 = vpop.f32.mrf.mxu0
        %v454 = vadd.f32 0.0, %v453
        %v455 = vpop.f32.mrf.mxu0
        %v456 = vadd.f32 0.0, %v455
        %457 = vmatmul.bf16.gmra.mxu0 %v309
        %v458 = vpop.f32.mrf.mxu0
        %v459 = vadd.f32 0.0, %v458
        %v460 = vpop.f32.mrf.mxu0
        %v461 = vadd.f32 0.0, %v460
        %462 = vdwg.mxu0
        %v463 = vadd.f32 %v384, %v386
        %v464 = vadd.f32 %v463, %v389
        %v465 = vadd.f32 %v464, %v391
        %v466 = vadd.f32 %v465, %v394
        %v467 = vadd.f32 %v466, %v396
        %v468 = vadd.f32 %v467, %v399
        %v469 = vadd.f32 %v468, %v401
        %v470 = vadd.f32 %v469, %v404
        %v471 = vadd.f32 %v470, %v406
        %v472 = vadd.f32 %v471, %v409
        %v473 = vadd.f32 %v472, %v411
        %v474 = vadd.f32 %v473, %v414
        %v475 = vadd.f32 %v474, %v416
        %v476 = vadd.f32 %v475, %v419
        %v477 = vadd.f32 %v476, %v421
        %v478 = vadd.f32 %v477, %v424
        %v479 = vadd.f32 %v478, %v426
        %v480 = vadd.f32 %v479, %v429
        %v481 = vadd.f32 %v480, %v431
        %v482 = vadd.f32 %v481, %v434
        %v483 = vadd.f32 %v482, %v436
        %v484 = vadd.f32 %v483, %v439
        %v485 = vadd.f32 %v484, %v441
        %v486 = vadd.f32 %v485, %v444
        %v487 = vadd.f32 %v486, %v446
        %v488 = vadd.f32 %v487, %v449
        %v489 = vadd.f32 %v488, %v451
        %v490 = vadd.f32 %v489, %v454
        %v491 = vadd.f32 %v490, %v456
        %v492 = vadd.f32 %v491, %v459
        %v493 = vadd.f32 %v492, %v461
        %v494 = vrot.slane %v493, 4
        %v495 = vadd.f32 %v493, %v494
        %v496 = vrot.slane %v495, 2
        %v497 = vadd.f32 %v495, %v496
        %v498 = vrot.slane %v497, 1
        %v499 = vadd.f32 %v497, %v498
        %v500 = vmul.f32 %v384, %v384
        %v501 = vmul.f32 %v386, %v386
        %v502 = vmul.f32 %v389, %v389
        %v503 = vmul.f32 %v391, %v391
        %v504 = vmul.f32 %v394, %v394
        %v505 = vmul.f32 %v396, %v396
        %v506 = vmul.f32 %v399, %v399
        %v507 = vmul.f32 %v401, %v401
        %v508 = vmul.f32 %v404, %v404
        %v509 = vmul.f32 %v406, %v406
        %v510 = vmul.f32 %v409, %v409
        %v511 = vmul.f32 %v411, %v411
        %v512 = vmul.f32 %v414, %v414
        %v513 = vmul.f32 %v416, %v416
        %v514 = vmul.f32 %v419, %v419
        %v515 = vmul.f32 %v421, %v421
        %v516 = vmul.f32 %v424, %v424
        %v517 = vmul.f32 %v426, %v426
        %v518 = vmul.f32 %v429, %v429
        %v519 = vmul.f32 %v431, %v431
        %v520 = vmul.f32 %v434, %v434
        %v521 = vmul.f32 %v436, %v436
        %v522 = vmul.f32 %v439, %v439
        %v523 = vmul.f32 %v441, %v441
        %v524 = vmul.f32 %v444, %v444
        %v525 = vmul.f32 %v446, %v446
        %v526 = vmul.f32 %v449, %v449
        %v527 = vmul.f32 %v451, %v451
        %v528 = vmul.f32 %v454, %v454
        %v529 = vmul.f32 %v456, %v456
        %v530 = vmul.f32 %v459, %v459
        %v531 = vmul.f32 %v461, %v461
        %v532 = vadd.f32 %v500, %v501
        %v533 = vadd.f32 %v532, %v502
        %v534 = vadd.f32 %v533, %v503
        %v535 = vadd.f32 %v534, %v504
        %v536 = vadd.f32 %v535, %v505
        %v537 = vadd.f32 %v536, %v506
        %v538 = vadd.f32 %v537, %v507
        %v539 = vadd.f32 %v538, %v508
        %v540 = vadd.f32 %v539, %v509
        %v541 = vadd.f32 %v540, %v510
        %v542 = vadd.f32 %v541, %v511
        %v543 = vadd.f32 %v542, %v512
        %v544 = vadd.f32 %v543, %v513
        %v545 = vadd.f32 %v544, %v514
        %v546 = vadd.f32 %v545, %v515
        %v547 = vadd.f32 %v546, %v516
        %v548 = vadd.f32 %v547, %v517
        %v549 = vadd.f32 %v548, %v518
        %v550 = vadd.f32 %v549, %v519
        %v551 = vadd.f32 %v550, %v520
        %v552 = vadd.f32 %v551, %v521
        %v553 = vadd.f32 %v552, %v522
        %v554 = vadd.f32 %v553, %v523
        %v555 = vadd.f32 %v554, %v524
        %v556 = vadd.f32 %v555, %v525
        %v557 = vadd.f32 %v556, %v526
        %v558 = vadd.f32 %v557, %v527
        %v559 = vadd.f32 %v558, %v528
        %v560 = vadd.f32 %v559, %v529
        %v561 = vadd.f32 %v560, %v530
        %v562 = vadd.f32 %v561, %v531
        %v563 = vrot.slane %v562, 4
        %v564 = vadd.f32 %v562, %v563
        %v565 = vrot.slane %v564, 2
        %v566 = vadd.f32 %v564, %v565
        %v567 = vrot.slane %v566, 1
        %v568 = vadd.f32 %v566, %v567
        %vm569 = vcmask 1040384
        %v570 = vsel %vm569, %v499, %v568
        %vm571 = vcmask 1041408
        %v572 = vsel %vm571, %v570, 0.0
        %573 = vst [vmem:[%s180] sm:$0xff] %v572
        %s574 = sand.u32 %s75, 1
        %s575 = scalar_lea.sflag [#allocation4], %s574
        %s576 = sand.u32 %s75, 1
        %s577 = smul.addr %s576, 8
        %s578 = scalar_lea.vmem [#allocation7], %s577
        // Predicated region
        $region37: #{tpu_custom_call.1} parent=27 // pred_check
          %p579 = pneg %p85
        $region38: #{tpu_custom_call.1} parent=27 // pred_check_branch
          %581 = sbr.rel (%p579) target = $region40
        $region39: #{tpu_custom_call.1} parent=27 // pred_region
          %583 = vsyncadd %s575, 0
          %s584 = smul.addr %s20, 8
          %s585 = scalar_lea.hbm %s2, %s584
          %s587 = sshll.u32 %s578, 4
          %s588 = int_to_ptr.vmem [resolvable:$true] %s587
          %s589 = sshll.u32 %s585, 4
          %s590 = int_to_ptr.hbm [resolvable:$true] %s589
          %592 = dma.vmem_to_hbm [thread:$0]  %s588, 128, %s590, %s575
        $region40: #{tpu_custom_call.1} parent=27 // pred_fallthru
          _
      $region28: #{tpu_custom_call.1} parent=5 // pred_fallthru
        _
      %p593 = scmp.le.s32.totalorder 2, %s15
      // Predicated region
      $region41: #{tpu_custom_call.1} parent=5 // pred_check
        %p594 = pneg %p593
      $region42: #{tpu_custom_call.1} parent=5 // pred_check_branch
        %596 = sbr.rel (%p594) target = $region44
      $region43: #{tpu_custom_call.1} parent=5 // pred_region
        %s597 = ssub.s32 %s15, 2
        // Predicated region
        $region45: #{tpu_custom_call.1} parent=43 // pred_check
          %p598 = pneg %p91
        $region46: #{tpu_custom_call.1} parent=43 // pred_check_branch
          %600 = sbr.rel (%p598) target = $region48
        $region47: #{tpu_custom_call.1} parent=43 // pred_region
          %s601 = sand.u32 %s76, 1
          %s602 = scalar_lea.sflag [#allocation4], %s601
          %s603 = sand.u32 %s76, 1
          %s604 = smul.addr %s603, 8
          %s605 = scalar_lea.vmem [#allocation7], %s604
          %607 = dma.done %s602, 128
        $region48: #{tpu_custom_call.1} parent=43 // pred_fallthru
          _
      $region44: #{tpu_custom_call.1} parent=5 // pred_fallthru
        _
    $region6: #{tpu_custom_call.1} parent=1 // loop_footer
      %s19 = sadd.s32 1, %s15
    $region7: #{tpu_custom_call.1} parent=1 // loop_footer_branch
      %14 = sbr.rel target = $region3
    $region8: #{tpu_custom_call.1} parent=1 // loop_exit
      _
    %608 = vsyncpa [#allocation3], 1
    %s609 = scalar_lea.sflag [#allocation3], 1
    %610 = vsyncpa %s609, 1
    %611 = vsyncpa [#allocation6], 1
    %612 = vsyncpa [#allocation4], 1
    %s613 = scalar_lea.sflag [#allocation4], 1
    %614 = vsyncpa %s613, 1

</llo_original>
